<compile_context>
chip_gen: v5e
topology: v5e:2x2
jax: 0.10.0
libtpu: 0.0.40
codegen_flags: <defaults>
</compile_context>

<pallas_src>
import functools

import jax
import jax.numpy as jnp
from jax.experimental import pallas as pl
from jax.experimental.pallas import tpu as pltpu

LANE = 128
_NEG_INF = -1e30


def _round_up(x, m):
    return ((x + m - 1) // m) * m


# ----------------------------------------------------------------------------
# Pallas kernel: fused mean/cross matmul (MXU) -> cdist -> softmax -> tile loss
# ----------------------------------------------------------------------------
def _vwc_kernel(x_ref, w_ref, c_sq_ref, logits_ref, probs_ref, loss_ref, *,
                sinkhorn_reg, k_pad, valid_rows, tile_rows):
    # x_ref:      (tile_c, S*D)        flattened, per-client samples
    # w_ref:      (S*D, k_pad + LANE)  [ mean_mat @ (-2 c^T) | mean_mat (lane-pad) ]
    # c_sq_ref:   (1, k_pad)           |c_k|^2, zero in padded cluster columns
    # logits_ref: (tile_c, k_pad)      padded cluster columns / client rows = -1e30
    x_flat = x_ref[...]

    # Single MXU push: columns [0, k_pad) = -2 * x_mean . c_k, columns [k_pad, +LANE)
    # = x_mean zero-padded to a full lane group (slices are lane-aligned & static).
    xw = jnp.dot(x_flat, w_ref[...], preferred_element_type=jnp.float32)
    neg2xc = xw[:, :k_pad]                                    # (tile_c, k_pad)
    x_mean = xw[:, k_pad:]                                    # (tile_c, LANE), zero-padded

    # cdist via the matmul identity, clamped at 0 before sqrt.
    xm_sq = jnp.sum(x_mean * x_mean, axis=1, keepdims=True)   # (tile_c, 1)
    d2 = xm_sq + c_sq_ref[...] + neg2xc
    dist = jnp.sqrt(jnp.maximum(d2, 0.0))                     # (tile_c, k_pad)

    # softmax(logits - dist) over clusters; padded cluster columns carry -1e30
    # logits so their probability is exactly 0.  Exact divide (not approx recip).
    a = logits_ref[...] - dist
    m = jnp.max(a, axis=1, keepdims=True)
    e = jnp.exp(a - m)
    probs = e / jnp.sum(e, axis=1, keepdims=True)
    probs_ref[...] = probs

    # In-tile loss reduction.  Padded client rows are masked with an iota so each
    # grid step can write just one tiny partial-loss block (no 128-wide slab).
    row_transport = jnp.sum(probs * dist, axis=1, keepdims=True)
    row_entropy = jnp.sum(probs * jnp.log(probs + 1e-10), axis=1, keepdims=True)
    row_loss = row_transport - sinkhorn_reg * row_entropy     # (tile_c, 1)

    row0 = pl.program_id(0) * tile_rows
    rows = row0 + jax.lax.broadcasted_iota(jnp.int32, (tile_rows, 1), 0)
    row_loss = jnp.where(rows < valid_rows, row_loss, 0.0)
    tile_loss = jnp.sum(row_loss, axis=0, keepdims=True)      # (1, 1)
    loss_ref[...] = jnp.broadcast_to(tile_loss, loss_ref.shape)


def vwc_forward_pallas(x_reduced, centers, logits, sinkhorn_reg):
    """x_reduced: (C, S, D) float32 PCA-reduced proxy points."""
    C, S, D = x_reduced.shape
    K = centers.shape[0]
    assert D <= LANE, "pca_dim must fit in one lane group"

    sd = S * D
    sd_lanes = _round_up(sd, LANE)          # lane-padded footprint of x in VMEM
    k_pad = _round_up(max(K, 1), LANE)

    # ---- generation-dependent VMEM budget -------------------------------------
    try:
        vmem_cap = int(pltpu.get_tpu_info().vmem_capacity_bytes)
    except Exception:
        vmem_cap = 64 * 1024 * 1024          # conservative fallback (v7x-sized)
    if vmem_cap >= 100 * 1024 * 1024:        # v5e / v6e: 128 MiB physical VMEM
        tile_budget = 44 * 1024 * 1024
        vmem_limit = 96 * 1024 * 1024
    else:                                    # v7x: 64 MiB physical VMEM
        tile_budget = 22 * 1024 * 1024
        vmem_limit = 48 * 1024 * 1024

    # Per-client-row bytes: EVERY double-buffered, lane-padded f32 stream
    # (x tile in, logits tile in, probs tile out).
    per_row_bytes = 2 * 4 * (sd_lanes + k_pad + k_pad)
    # Grid-invariant residents (still double-buffered by the pipeline): fused W,
    # |c|^2, per-tile loss block (sublane-padded to 8).
    sd_sub = _round_up(sd, 8)
    const_bytes = 2 * 4 * (sd_sub * (k_pad + LANE) + 8 * k_pad + 8 * LANE)

    avail = max(tile_budget - const_bytes, 8 * per_row_bytes)
    tile_c = (avail // per_row_bytes) // 8 * 8
    tile_c = int(max(8, min(tile_c, _round_up(C, 8))))
    # Keep >= 2 grid steps once both halves are big enough (~>=512 rows each) so
    # v7x's two TensorCores both get work under dimension_semantics=("parallel",).
    if C >= 1024:
        half = _round_up((C + 1) // 2, 8)
        tile_c = int(min(tile_c, half))
    c_pad = int(_round_up(C, tile_c))
    n_tiles = c_pad // tile_c

    # ---- input prep (plain JAX; reshape of contiguous dims is free) -----------
    xf = x_reduced.astype(jnp.float32).reshape(C, sd)
    xf = jnp.pad(xf, ((0, c_pad - C), (0, 0)))

    centers_f = centers.astype(jnp.float32)                                   # (K, D)
    centers_t = jnp.pad(centers_f.T, ((0, 0), (0, k_pad - K)))                # (D, k_pad)

    # Block-diagonal ones/S matrix: (x_flat @ mean_mat)[c, d] = mean_s x[c, s, d].
    mean_mat = jnp.tile(jnp.eye(D, dtype=jnp.float32), (S, 1)) / float(S)     # (sd, D)
    cross = jnp.dot(mean_mat, -2.0 * centers_t)                               # (sd, k_pad)
    mean_block = jnp.pad(mean_mat, ((0, 0), (0, LANE - D)))                   # (sd, LANE)
    w = jnp.concatenate([cross, mean_block], axis=1)                          # (sd, k_pad+LANE)

    c_sq = jnp.pad(jnp.sum(centers_f * centers_f, axis=1)[None, :],
                   ((0, 0), (0, k_pad - K)))                                  # (1, k_pad)

    lg = jnp.pad(logits.astype(jnp.float32), ((0, 0), (0, k_pad - K)),
                 constant_values=_NEG_INF)                                    # pad clusters
    lg = jnp.pad(lg, ((0, c_pad - C), (0, 0)), constant_values=_NEG_INF)      # pad clients

    kernel = functools.partial(_vwc_kernel,
                               sinkhorn_reg=float(sinkhorn_reg),
                               k_pad=k_pad,
                               valid_rows=C,
                               tile_rows=tile_c)

    flops = (2 * c_pad * sd * (k_pad + LANE)   # fused matmul
             + 14 * c_pad * k_pad)             # dist / softmax / loss elementwise
    transcendentals = 3 * c_pad * k_pad        # exp, log, sqrt
    bytes_accessed = 4 * (c_pad * sd + sd * (k_pad + LANE) + k_pad
                          + 2 * c_pad * k_pad + n_tiles * 8 * LANE)

    probs_pad, loss_tiles = pl.pallas_call(
        kernel,
        out_shape=(
            jax.ShapeDtypeStruct((c_pad, k_pad), jnp.float32),
            jax.ShapeDtypeStruct((n_tiles, 8, LANE), jnp.float32),
        ),
        grid_spec=pltpu.PrefetchScalarGridSpec(
            num_scalar_prefetch=0,
            grid=(n_tiles,),
            in_specs=[
                pl.BlockSpec((tile_c, sd), lambda i: (i, 0)),           # x (tiled over C)
                pl.BlockSpec((sd, k_pad + LANE), lambda i: (0, 0)),     # fused W (resident)
                pl.BlockSpec((1, k_pad), lambda i: (0, 0)),             # |c|^2 (resident)
                pl.BlockSpec((tile_c, k_pad), lambda i: (i, 0)),        # logits (tiled)
            ],
            out_specs=(
                pl.BlockSpec((tile_c, k_pad), lambda i: (i, 0)),        # probs (lane-dense)
                pl.BlockSpec((1, 8, LANE), lambda i: (i, 0, 0)),        # per-tile loss
            ),
        ),
        compiler_params=pltpu.CompilerParams(
            dimension_semantics=("parallel",),      # C axis sharded across TCs on v7x
            vmem_limit_bytes=vmem_limit,
        ),
        cost_estimate=pl.CostEstimate(
            flops=flops,
            transcendentals=transcendentals,
            bytes_accessed=bytes_accessed,
        ),
    )(xf, w, c_sq, lg)

    probs = probs_pad[:C, :K]
    loss = jnp.sum(loss_tiles[:, 0, 0])
    return probs, loss


# ----------------------------------------------------------------------------
# Plain-JAX glue: per-client PCA fit_transform and padding to pca_dim.
# ----------------------------------------------------------------------------
def _pca_fit_transform(arr, n_components):
    # arr: (num_samples, feat_dim)
    mean = jnp.mean(arr, axis=0, keepdims=True)
    xc = arr - mean
    u, s, vt = jnp.linalg.svd(xc, full_matrices=False)
    # TODO(synk): sklearn's svd_flip sign convention (u/v based) may differ by a sign
    # per component; this uses the Vt-row max-abs convention.
    max_abs_cols = jnp.argmax(jnp.abs(vt), axis=1)
    signs = jnp.sign(vt[jnp.arange(vt.shape[0]), max_abs_cols])
    signs = jnp.where(signs == 0, 1.0, signs)
    transformed = (u * signs[None, :]) * s[None, :]
    return transformed[:, :n_components]


def reduce_dim(proxy_points, pca_dim):
    num_clients, num_samples, feat_dim = proxy_points.shape
    real_dim = min(pca_dim, num_samples - 1, feat_dim)
    reduced = jax.vmap(lambda a: _pca_fit_transform(a, real_dim))(proxy_points)
    if real_dim < pca_dim:
        reduced = jnp.pad(reduced, ((0, 0), (0, 0), (0, pca_dim - real_dim)))
    return reduced.astype(jnp.float32)


# ----------------------------------------------------------------------------
# Module-equivalent wrapper
# ----------------------------------------------------------------------------
class VariationalWassersteinClusteringPallas:
    def __init__(self, num_clients, num_clusters, proxy_dim, pca_dim=4,
                 sinkhorn_reg=0.01, key=None):
        self.num_clients = num_clients
        self.num_clusters = num_clusters
        self.pca_dim = pca_dim
        self.sinkhorn_reg = sinkhorn_reg
        if key is None:
            key = jax.random.PRNGKey(0)
        k1, k2 = jax.random.split(key)
        # Deterministic "randn * scale" parameter init, mirroring nn.Parameter shapes.
        self.centers = (jax.random.normal(k1, (num_clusters, pca_dim), jnp.float32)
                        * 0.1)
        self.logits = (jax.random.normal(k2, (num_clients, num_clusters), jnp.float32)
                       * 0.01)

    def forward(self, proxy_points):
        x = reduce_dim(proxy_points, self.pca_dim)     # (C, S, pca_dim)
        return vwc_forward_pallas(x, self.centers, self.logits, self.sinkhorn_reg)


if __name__ == "__main__":
    key = jax.random.PRNGKey(0)
    k_params, k_data = jax.random.split(key)

    num_clients, num_samples, feat_dim = 8, 8, 32
    num_clusters, pca_dim = 4, 4

    module = VariationalWassersteinClusteringPallas(
        num_clients=num_clients,
        num_clusters=num_clusters,
        proxy_dim=feat_dim,
        pca_dim=pca_dim,
        sinkhorn_reg=0.01,
        key=k_params,
    )

    proxy_points = jax.random.normal(
        k_data, (num_clients, num_samples, feat_dim), jnp.float32)

    probs, loss = module.forward(proxy_points)
    probs = jax.block_until_ready(probs)
    loss = jax.block_until_ready(loss)

    # Pure-JAX reference of the same forward pass (same PCA output).
    x_red = reduce_dim(proxy_points, pca_dim)
    x_mean = jnp.mean(x_red, axis=1)
    dist_ref = jnp.sqrt(
        jnp.sum((x_mean[:, None, :] - module.centers[None, :, :]) ** 2, axis=-1))
    p_ref = jax.nn.softmax(module.logits - dist_ref, axis=1)
    loss_ref = (jnp.sum(p_ref * dist_ref)
                - module.sinkhorn_reg * jnp.sum(p_ref * jnp.log(p_ref + 1e-10)))

    assert probs.shape == (num_clients, num_clusters)
    assert bool(jnp.allclose(jnp.sum(probs, axis=1), 1.0, atol=2e-3))
    assert bool(jnp.allclose(probs, p_ref, atol=2e-3))
    assert bool(jnp.allclose(loss, loss_ref, atol=2e-3))
    assert bool(jnp.isfinite(loss))

    print("KERNEL_OK")
</pallas_src>

<mosaic_0001>
module attributes {stable_mosaic.version = 11 : i64} {
  func.func @_vwc_kernel(%arg0: i32, %arg1: memref<8x32xf32, #tpu.memory_space<vmem>>, %arg2: memref<32x256xf32, #tpu.memory_space<vmem>>, %arg3: memref<1x128xf32, #tpu.memory_space<vmem>>, %arg4: memref<8x128xf32, #tpu.memory_space<vmem>>, %arg5: memref<8x128xf32, #tpu.memory_space<vmem>>, %arg6: memref<1x8x128xf32, #tpu.memory_space<vmem>>) attributes {dimension_semantics = [#tpu.dimension_semantics<parallel>], iteration_bounds = array<i64: 1>, scalar_prefetch = 0 : i64, scratch_operands = 0 : i64, tpu.core_type = #tpu.core_type<tc>, window_params = [{transform_indices = @transform_0, window_bounds = array<i64: 8, 32>}, {pipeline_mode = #tpu.pipeline_mode<synchronous>, transform_indices = @transform_1, window_bounds = array<i64: 32, 256>}, {pipeline_mode = #tpu.pipeline_mode<synchronous>, transform_indices = @transform_2, window_bounds = array<i64: 1, 128>}, {transform_indices = @transform_3, window_bounds = array<i64: 8, 128>}, {transform_indices = @transform_4, window_bounds = array<i64: 8, 128>}, {transform_indices = @transform_5, window_bounds = array<i64: 1, 8, 128>}]} {
    %c0 = arith.constant 0 : index
    %c0_0 = arith.constant 0 : index
    %0 = vector.load %arg1[%c0, %c0_0] : memref<8x32xf32, #tpu.memory_space<vmem>>, vector<8x32xf32>
    %c0_1 = arith.constant 0 : index
    %c0_2 = arith.constant 0 : index
    %1 = vector.load %arg2[%c0_1, %c0_2] : memref<32x256xf32, #tpu.memory_space<vmem>>, vector<32x256xf32>
    %cst = arith.constant dense<0.000000e+00> : vector<8x256xf32>
    %2 = tpu.matmul %0, %1, %cst {dimension_numbers = #tpu.dot_dimension_numbers<[1], [0], [0], [1], [0, 0, 1, 1], [], []>} : vector<8x32xf32>, vector<32x256xf32>, vector<8x256xf32> -> vector<8x256xf32>
    %3 = vector.extract_strided_slice %2 {offsets = [0, 0], sizes = [8, 128], strides = [1, 1]} : vector<8x256xf32> to vector<8x128xf32>
    %4 = vector.extract_strided_slice %2 {offsets = [0, 128], sizes = [8, 128], strides = [1, 1]} : vector<8x256xf32> to vector<8x128xf32>
    %5 = arith.mulf %4, %4 : vector<8x128xf32>
    %cst_3 = arith.constant dense<0.000000e+00> : vector<8xf32>
    %6 = vector.multi_reduction <add>, %5, %cst_3 [1] : vector<8x128xf32> to vector<8xf32>
    %7 = vector.shape_cast %6 : vector<8xf32> to vector<8x1xf32>
    %c0_4 = arith.constant 0 : index
    %c0_5 = arith.constant 0 : index
    %8 = vector.load %arg3[%c0_4, %c0_5] : memref<1x128xf32, #tpu.memory_space<vmem>>, vector<1x128xf32>
    %9 = vector.broadcast %7 : vector<8x1xf32> to vector<8x128xf32>
    %10 = vector.broadcast %8 : vector<1x128xf32> to vector<8x128xf32>
    %11 = arith.addf %9, %10 : vector<8x128xf32>
    %12 = arith.addf %11, %3 : vector<8x128xf32>
    %cst_6 = arith.constant 0.000000e+00 : f32
    %13 = vector.broadcast %cst_6 : f32 to vector<8x128xf32>
    %14 = arith.maximumf %12, %13 : vector<8x128xf32>
    %15 = math.sqrt %14 : vector<8x128xf32>
    %c0_7 = arith.constant 0 : index
    %c0_8 = arith.constant 0 : index
    %16 = vector.load %arg4[%c0_7, %c0_8] : memref<8x128xf32, #tpu.memory_space<vmem>>, vector<8x128xf32>
    %17 = arith.subf %16, %15 : vector<8x128xf32>
    %cst_9 = arith.constant dense<0xFF800000> : vector<8xf32>
    %18 = vector.multi_reduction <maximumf>, %17, %cst_9 [1] : vector<8x128xf32> to vector<8xf32>
    %19 = vector.shape_cast %18 : vector<8xf32> to vector<8x1xf32>
    %20 = vector.broadcast %19 : vector<8x1xf32> to vector<8x128xf32>
    %21 = arith.subf %17, %20 : vector<8x128xf32>
    %22 = math.exp %21 : vector<8x128xf32>
    %cst_10 = arith.constant dense<0.000000e+00> : vector<8xf32>
    %23 = vector.multi_reduction <add>, %22, %cst_10 [1] : vector<8x128xf32> to vector<8xf32>
    %24 = vector.shape_cast %23 : vector<8xf32> to vector<8x1xf32>
    %25 = vector.broadcast %24 : vector<8x1xf32> to vector<8x128xf32>
    %26 = arith.divf %22, %25 : vector<8x128xf32>
    %c0_11 = arith.constant 0 : index
    %c0_12 = arith.constant 0 : index
    %27 = vector.load %arg5[%c0_11, %c0_12] : memref<8x128xf32, #tpu.memory_space<vmem>>, vector<8x128xf32>
    tpu.vector_store %arg5[%c0_11, %c0_12], %26 {strides = array<i32>} : memref<8x128xf32, #tpu.memory_space<vmem>>, vector<8x128xf32>,
    %28 = arith.mulf %26, %15 : vector<8x128xf32>
    %cst_13 = arith.constant dense<0.000000e+00> : vector<8xf32>
    %29 = vector.multi_reduction <add>, %28, %cst_13 [1] : vector<8x128xf32> to vector<8xf32>
    %30 = vector.shape_cast %29 : vector<8xf32> to vector<8x1xf32>
    %cst_14 = arith.constant 1.000000e-10 : f32
    %31 = vector.broadcast %cst_14 : f32 to vector<8x128xf32>
    %32 = arith.addf %26, %31 : vector<8x128xf32>
    %33 = math.log %32 : vector<8x128xf32>
    %34 = arith.mulf %26, %33 : vector<8x128xf32>
    %cst_15 = arith.constant dense<0.000000e+00> : vector<8xf32>
    %35 = vector.multi_reduction <add>, %34, %cst_15 [1] : vector<8x128xf32> to vector<8xf32>
    %36 = vector.shape_cast %35 : vector<8xf32> to vector<8x1xf32>
    %cst_16 = arith.constant 0.00999999977 : f32
    %37 = vector.broadcast %cst_16 : f32 to vector<8x1xf32>
    %38 = arith.mulf %37, %36 : vector<8x1xf32>
    %39 = arith.subf %30, %38 : vector<8x1xf32>
    %c8_i32 = arith.constant 8 : i32
    %40 = arith.muli %arg0, %c8_i32 : i32
    %41 = tpu.iota {dimensions = array<i32: 0>} : vector<8x1xi32>
    %42 = vector.broadcast %40 : i32 to vector<8x1xi32>
    %43 = arith.addi %42, %41 : vector<8x1xi32>
    %c8_i32_17 = arith.constant 8 : i32
    %44 = vector.broadcast %c8_i32_17 : i32 to vector<8x1xi32>
    %45 = arith.cmpi slt, %43, %44 : vector<8x1xi32>
    %cst_18 = arith.constant 0.000000e+00 : f32
    %46 = vector.broadcast %cst_18 : f32 to vector<8x1xf32>
    %47 = arith.select %45, %39, %46 : vector<8x1xi1>, vector<8x1xf32>
    %cst_19 = arith.constant dense<0.000000e+00> : vector<1xf32>
    %48 = vector.multi_reduction <add>, %47, %cst_19 [0] : vector<8x1xf32> to vector<1xf32>
    %49 = vector.shape_cast %48 : vector<1xf32> to vector<1x1xf32>
    %50 = vector.shape_cast %49 : vector<1x1xf32> to vector<1x1x1xf32>
    %51 = vector.broadcast %50 : vector<1x1x1xf32> to vector<1x8x128xf32>
    %c0_20 = arith.constant 0 : index
    %c0_21 = arith.constant 0 : index
    %c0_22 = arith.constant 0 : index
    %52 = vector.load %arg6[%c0_20, %c0_21, %c0_22] : memref<1x8x128xf32, #tpu.memory_space<vmem>>, vector<1x8x128xf32>
    tpu.vector_store %arg6[%c0_20, %c0_21, %c0_22], %51 {strides = array<i32>} : memref<1x8x128xf32, #tpu.memory_space<vmem>>, vector<1x8x128xf32>,
    return
  }
  func.func @transform_0(%arg0: i32) -> (i32, i32) {
    %c0_i32 = arith.constant 0 : i32
    %c0_i32_0 = arith.constant 0 : i32
    return %arg0, %c0_i32 : i32, i32
  }
  func.func @transform_1(%arg0: i32) -> (i32, i32) {
    %c0_i32 = arith.constant 0 : i32
    %c0_i32_0 = arith.constant 0 : i32
    %c0_i32_1 = arith.constant 0 : i32
    return %c0_i32, %c0_i32_0 : i32, i32
  }
  func.func @transform_2(%arg0: i32) -> (i32, i32) {
    %c0_i32 = arith.constant 0 : i32
    %c0_i32_0 = arith.constant 0 : i32
    %c0_i32_1 = arith.constant 0 : i32
    return %c0_i32, %c0_i32_0 : i32, i32
  }
  func.func @transform_3(%arg0: i32) -> (i32, i32) {
    %c0_i32 = arith.constant 0 : i32
    %c0_i32_0 = arith.constant 0 : i32
    return %arg0, %c0_i32 : i32, i32
  }
  func.func @transform_4(%arg0: i32) -> (i32, i32) {
    %c0_i32 = arith.constant 0 : i32
    %c0_i32_0 = arith.constant 0 : i32
    return %arg0, %c0_i32 : i32, i32
  }
  func.func @transform_5(%arg0: i32) -> (i32, i32, i32) {
    %c0_i32 = arith.constant 0 : i32
    %c0_i32_0 = arith.constant 0 : i32
    %c0_i32_1 = arith.constant 0 : i32
    return %arg0, %c0_i32, %c0_i32_0 : i32, i32, i32
  }
}

</mosaic_0001>

<llo_original>
// kernel: tpu_custom_call.1
$region0: #{tpu_custom_call.1}
  #allocation0 [shape = 'u32[]', space=smem, size = 0x4, offset = 0x4, fixed_abs, tag = 'smem constant byte address 0x4 - core index']
  #allocation1 [shape = 'u32[72,128]{1,0:T(1,128)}', space=vmem, size = 0x9000, scoped, tag = 'internal scratch']
  %s0 = inlined_call_operand.hbm [shape: f32[8,32], index: 0, kind: input, shape index: {}]
  %s1 = inlined_call_operand.hbm [shape: f32[32,256], index: 1, kind: input, shape index: {}]
  %s2 = inlined_call_operand.vmem [shape: f32[1,128], index: 2, kind: input, shape index: {}]
  %s3 = inlined_call_operand.hbm [shape: f32[8,128], index: 3, kind: input, shape index: {}]
  %s4 = inlined_call_operand.hbm [shape: f32[8,128], index: 4, kind: output, shape index: {0}]
  %s5 = inlined_call_operand.hbm [shape: f32[1,8,128], index: 5, kind: output, shape index: {1}]
  %6 = xla_tuple %s4, %s5
  %s7 = sld [smem:[#allocation0]]
  $region46: #{tpu_custom_call.1} parent=0
    _
  %s9 = ssub.s32 1, %s7
  %s10 = scalar_select 0, %s9, %s7
  $region1: #{tpu_custom_call.1} parent=0
    #allocation2 [shape = 'u8[4096]{0}', space=vmem, size = 0x1000, scoped, tag = 'input window, operand 0, single buffered']
    #allocation3 [shape = 's32[1]{0}', space=sflag, size = 0x4, scoped, tag = 'scoped memory for tpu_custom_call.1']
    #allocation4 [shape = 's32[1]{0}', space=sflag, size = 0x4, scoped, tag = 'scoped memory for tpu_custom_call.1']
    #allocation5 [shape = 'u8[32768]{0}', space=vmem, size = 0x8000, scoped, tag = 'input window, operand 1, single buffered']
    #allocation6 [shape = 's32[1]{0}', space=sflag, size = 0x4, scoped, tag = 'scoped memory for tpu_custom_call.1']
    #allocation7 [shape = 'u8[4096]{0}', space=vmem, size = 0x1000, scoped, tag = 'input window, operand 3, single buffered']
    #allocation8 [shape = 'u8[4096]{0}', space=vmem, size = 0x1000, scoped, tag = 'output window, operand 0, single buffered']
    #allocation9 [shape = 'u8[4096]{0}', space=vmem, size = 0x1000, scoped, tag = 'output window, operand 1, single buffered']
    #allocation10 [shape = 's32[1]{0}', space=sflag, size = 0x4, scoped, tag = 'scoped memory for tpu_custom_call.1']
    %11 = vsyncpa [#allocation3], 0
    %12 = vsyncpa [#allocation6], 0
    %13 = vsyncpa [#allocation4], 0
    %14 = vsyncpa [#allocation10], 0
    // Predicated region
    $region2: #{tpu_custom_call.1} parent=1 // pred_check
      _
    $region3: #{tpu_custom_call.1} parent=1 // pred_check_branch
      %16 = sbr.rel (0) target = $region5
    $region4: #{tpu_custom_call.1} parent=1 // pred_region
      %18 = vsyncadd [#allocation3], 0
      %s20 = sshll.u32 %s0, 4
      %s21 = int_to_ptr.hbm [resolvable:$true] %s20
      %s22 = sshll.u32 [#allocation2], 4
      %s23 = int_to_ptr.vmem [resolvable:$true] %s22
      %25 = dma.hbm_to_vmem [thread:$0]  %s21, 128, %s23, [#allocation3]
    $region5: #{tpu_custom_call.1} parent=1 // pred_fallthru
      _
    // Predicated region
    $region6: #{tpu_custom_call.1} parent=1 // pred_check
      _
    $region7: #{tpu_custom_call.1} parent=1 // pred_check_branch
      %27 = sbr.rel (0) target = $region9
    $region8: #{tpu_custom_call.1} parent=1 // pred_region
      %29 = vsyncadd [#allocation6], 0
      %s30 = sshll.u32 %s1, 4
      %s31 = int_to_ptr.hbm [resolvable:$true] %s30
      %s32 = sshll.u32 [#allocation5], 4
      %s33 = int_to_ptr.vmem [resolvable:$true] %s32
      %38 = dma.hbm_to_vmem [thread:$0]  %s31, 1024, %s33, [#allocation6], 256, 256, 16
    $region9: #{tpu_custom_call.1} parent=1 // pred_fallthru
      _
    // Predicated region
    $region10: #{tpu_custom_call.1} parent=1 // pred_check
      _
    $region11: #{tpu_custom_call.1} parent=1 // pred_check_branch
      %40 = sbr.rel (0) target = $region13
    $region12: #{tpu_custom_call.1} parent=1 // pred_region
      _
    $region13: #{tpu_custom_call.1} parent=1 // pred_fallthru
      _
    // Predicated region
    $region14: #{tpu_custom_call.1} parent=1 // pred_check
      _
    $region15: #{tpu_custom_call.1} parent=1 // pred_check_branch
      %42 = sbr.rel (0) target = $region17
    $region16: #{tpu_custom_call.1} parent=1 // pred_region
      %44 = vsyncadd [#allocation6], 0
      %s46 = sshll.u32 %s3, 4
      %s47 = int_to_ptr.hbm [resolvable:$true] %s46
      %s48 = sshll.u32 [#allocation7], 4
      %s49 = int_to_ptr.vmem [resolvable:$true] %s48
      %51 = dma.hbm_to_vmem [thread:$0]  %s47, 128, %s49, [#allocation6]
    $region17: #{tpu_custom_call.1} parent=1 // pred_fallthru
      _
    // Predicated region
    $region18: #{tpu_custom_call.1} parent=1 // pred_check
      _
    $region19: #{tpu_custom_call.1} parent=1 // pred_check_branch
      %53 = sbr.rel (0) target = $region21
    $region20: #{tpu_custom_call.1} parent=1 // pred_region
      %55 = dma.done [#allocation3], 128
    $region21: #{tpu_custom_call.1} parent=1 // pred_fallthru
      _
    // Predicated region
    $region22: #{tpu_custom_call.1} parent=1 // pred_check
      _
    $region23: #{tpu_custom_call.1} parent=1 // pred_check_branch
      %57 = sbr.rel (0) target = $region25
    $region24: #{tpu_custom_call.1} parent=1 // pred_region
      %59 = dma.done [#allocation6], 1024
    $region25: #{tpu_custom_call.1} parent=1 // pred_fallthru
      _
    // Predicated region
    $region26: #{tpu_custom_call.1} parent=1 // pred_check
      _
    $region27: #{tpu_custom_call.1} parent=1 // pred_check_branch
      %61 = sbr.rel (0) target = $region29
    $region28: #{tpu_custom_call.1} parent=1 // pred_region
      %63 = dma.done [#allocation6], 128
    $region29: #{tpu_custom_call.1} parent=1 // pred_fallthru
      _
    %v64 = vld [vmem:[#allocation2] sm:$0xff]
    %v65 = vld [vmem:[#allocation5] sm:$0xff]
    %v66 = vld [vmem:[#allocation5 + $0x8] sm:$0xff]
    %v67 = vld [vmem:[#allocation5 + $0x10] sm:$0xff]
    %v68 = vld [vmem:[#allocation5 + $0x18] sm:$0xff]
    %v69 = vld [vmem:[#allocation5 + $0x20] sm:$0xff]
    %v70 = vld [vmem:[#allocation5 + $0x28] sm:$0xff]
    %v71 = vld [vmem:[#allocation5 + $0x30] sm:$0xff]
    %v72 = vld [vmem:[#allocation5 + $0x38] sm:$0xff]
    %vm73 = vcmask 261120
    %v75 = vsel %vm73, %v64, 0
    %77 = vmatpush.msra.mxu0 0.0
    %78 = vmatpush.msra.mxu0 0.0
    %79 = vmatpush.msra.mxu0 0.0
    %80 = vmatpush.msra.mxu0 0.0
    %81 = vmatpush.msra.mxu0 0.0
    %82 = vmatpush.msra.mxu0 0.0
    %83 = vmatpush.msra.mxu0 0.0
    %84 = vmatpush.msra.mxu0 0.0
    %85 = vmatpush.msra.mxu0 0.0
    %86 = vmatpush.msra.mxu0 0.0
    %87 = vmatpush.msra.mxu0 0.0
    %88 = vmatpush.msra.mxu0 0.0
    %89 = vmatpush.msra.mxu0 %v71
    %90 = vmatpush.msra.mxu0 %v69
    %91 = vmatpush.msra.mxu0 %v67
    %92 = vmatpush.msra.mxu0 %v65
    %93 = vmatmul.f32.gmra.mxu0 %v75
    %v94 = vpop.f32.mrf.mxu0
    %v95 = vadd.f32 0.0, %v94
    %96 = vdwg.mxu0
    %97 = vmatpush.msra.mxu0 0.0
    %98 = vmatpush.msra.mxu0 0.0
    %99 = vmatpush.msra.mxu0 0.0
    %100 = vmatpush.msra.mxu0 0.0
    %101 = vmatpush.msra.mxu0 0.0
    %102 = vmatpush.msra.mxu0 0.0
    %103 = vmatpush.msra.mxu0 0.0
    %104 = vmatpush.msra.mxu0 0.0
    %105 = vmatpush.msra.mxu0 0.0
    %106 = vmatpush.msra.mxu0 0.0
    %107 = vmatpush.msra.mxu0 0.0
    %108 = vmatpush.msra.mxu0 0.0
    %109 = vmatpush.msra.mxu0 %v72
    %110 = vmatpush.msra.mxu0 %v70
    %111 = vmatpush.msra.mxu0 %v68
    %112 = vmatpush.msra.mxu0 %v66
    %113 = vmatmul.f32.gmra.mxu0 %v75
    %v114 = vpop.f32.mrf.mxu0
    %v115 = vadd.f32 0.0, %v114
    %116 = vdwg.mxu0
    %v117 = vmul.f32 %v115, %v115
    %118 = vadd.xlane.f32.xlu0 %v117
    %v119 = vpop.xlane.xlu0 %118
    %v120 = vld [vmem:[%s2] sm:$0x1]
    %v122 = vperm.slane %v120, 0
    %v124 = vadd.f32 %v119, %v122
    %v125 = vadd.f32 %v124, %v95
    %v126 = vmax.f32 %v125, 0.0
    %v127 = vrsqrt.pop %v126
    %v128 = vmul.f32 %v127, %v126
    %v129 = vmul.f32 %v128, %v127
    %v130 = vmul.f32 0.5, %v129
    %v131 = vsub.f32 1.5, %v130
    %v132 = vmul.f32 %v127, %v131
    %v133 = vmul.f32 %v126, %v132
    %vm134 = vcmp.eq.f32.partialorder %v126, inf
    %v135 = vsel %vm134, %v126, %v133
    %vm136 = vcmp.eq.f32.partialorder %v126, 0.0
    %v137 = vand.u32 %v126, 2147483648
    %v138 = vsel %vm136, %v137, %v135
    %v139 = vld [vmem:[#allocation7] sm:$0xff]
    %v140 = vsub.f32 %v139, %v138
    %141 = vmax.xlane.f32.xlu0 %v140
    %v142 = vpop.xlane.xlu0 %141
    %v143 = vsub.f32 %v140, %v142
    %v144 = vmul.f32 %v143, 1.442695
    %v145 = vpow.pop %v144
    %146 = vadd.xlane.f32.xlu0 %v145
    %v147 = vpop.xlane.xlu0 %146
    %v148 = vrcp.pop %v147
    %v149 = vmul.f32 %v147, %v148
    %v150 = vsub.f32 1.0, %v149
    %v151 = vmul.f32 %v148, %v150
    %v152 = vadd.f32 %v148, %v151
    %vm153 = vweird.f32 %v147
    %vm154 = vweird.f32 %v148
    %vm155 = vmor %vm153, %vm154
    %v156 = vsel %vm155, %v148, %v152
    %v157 = vand.u32 2147483647, %v147
    %vm158 = vcmp.eq.f32.partialorder %v157, 8.507059e+37
    %v159 = vand.u32 %v147, 2147483648
    %v160 = vor.u32 1.1754944e-38, %v159
    %v161 = vsel %vm158, %v160, %v156
    %v162 = vmul.f32 %v145, %v161
    %163 = vst [vmem:[#allocation8] sm:$0xff] %v162
    %v164 = vmul.f32 %v162, %v138
    %165 = vadd.xlane.f32.xlu0 %v164
    %v166 = vpop.xlane.xlu0 %165
    %v167 = vadd.f32 %v162, 1e-10
    %v168 = vlog2.pop %v167
    %v169 = vmul.f32 %v168, 0.6931472
    %v170 = vmul.f32 %v162, %v169
    %171 = vadd.xlane.f32.xlu0 %v170
    %v172 = vpop.xlane.xlu0 %171
    %v173 = vmul.f32 %v172, 0.01
    %v174 = vsub.f32 %v166, %v173
    %s175 = smul.u32 0, 8
    %v176 = vlaneseq
    %v177 = vshrl.u32 %v176, 7
    %v178 = vstv %s175
    %v179 = vadd.s32 %v178, %v177
    %vm180 = vcmp.lt.s32.totalorder %v179, 8
    %v181 = vsel %vm180, %v174, 0.0
    %v182 = vrot.slane %v181, 4
    %v183 = vadd.f32 %v181, %v182
    %v184 = vrot.slane %v183, 2
    %v185 = vadd.f32 %v183, %v184
    %v186 = vrot.slane %v185, 1
    %v187 = vadd.f32 %v185, %v186
    %188 = vst [vmem:[#allocation9] sm:$0xff] %v187
    // Predicated region
    $region30: #{tpu_custom_call.1} parent=1 // pred_check
      _
    $region31: #{tpu_custom_call.1} parent=1 // pred_check_branch
      %190 = sbr.rel (0) target = $region33
    $region32: #{tpu_custom_call.1} parent=1 // pred_region
      %192 = vsyncadd [#allocation4], 0
      %s194 = sshll.u32 [#allocation8], 4
      %s195 = int_to_ptr.vmem [resolvable:$true] %s194
      %s196 = sshll.u32 %s4, 4
      %s197 = int_to_ptr.hbm [resolvable:$true] %s196
      %199 = dma.vmem_to_hbm [thread:$0]  %s195, 128, %s197, [#allocation4]
    $region33: #{tpu_custom_call.1} parent=1 // pred_fallthru
      _
    // Predicated region
    $region34: #{tpu_custom_call.1} parent=1 // pred_check
      _
    $region35: #{tpu_custom_call.1} parent=1 // pred_check_branch
      %201 = sbr.rel (0) target = $region37
    $region36: #{tpu_custom_call.1} parent=1 // pred_region
      %203 = vsyncadd [#allocation10], 0
      %s205 = sshll.u32 [#allocation9], 4
      %s206 = int_to_ptr.vmem [resolvable:$true] %s205
      %s207 = sshll.u32 %s5, 4
      %s208 = int_to_ptr.hbm [resolvable:$true] %s207
      %210 = dma.vmem_to_hbm [thread:$0]  %s206, 128, %s208, [#allocation10]
    $region37: #{tpu_custom_call.1} parent=1 // pred_fallthru
      _
    // Predicated region
    $region38: #{tpu_custom_call.1} parent=1 // pred_check
      _
    $region39: #{tpu_custom_call.1} parent=1 // pred_check_branch
      %212 = sbr.rel (0) target = $region41
    $region40: #{tpu_custom_call.1} parent=1 // pred_region
      %214 = dma.done [#allocation4], 128
    $region41: #{tpu_custom_call.1} parent=1 // pred_fallthru
      _
    // Predicated region
    $region42: #{tpu_custom_call.1} parent=1 // pred_check
      _
    $region43: #{tpu_custom_call.1} parent=1 // pred_check_branch
      %216 = sbr.rel (0) target = $region45
    $region44: #{tpu_custom_call.1} parent=1 // pred_region
      %218 = dma.done [#allocation10], 128
    $region45: #{tpu_custom_call.1} parent=1 // pred_fallthru
      _
    %219 = vsyncpa [#allocation3], 1
    %220 = vsyncpa [#allocation6], 1
    %221 = vsyncpa [#allocation4], 1
    %222 = vsyncpa [#allocation10], 1

</llo_original>
